<compile_context>
chip_gen: v6e
topology: v6e:2x2x1
jax: 0.10.0
libtpu: 0.0.40
codegen_flags: <defaults>
</compile_context>

<pallas_src>
import functools
import math

import jax
import jax.numpy as jnp
from jax.experimental import pallas as pl
from jax.experimental.pallas import tpu as pltpu


def _round_up(x, m):
    return ((x + m - 1) // m) * m


# -----------------------------------------------------------------------------
# Kernel: one grid step == one chunk of `chunk` RNN timesteps.
#   x_ref   (chunk*BP, IP)  raw inputs for this chunk (time-major, batch flattened in)
#   h0_ref  (BP, HP)        initial hidden (resident)
#   wxh_ref (IP, HP), bh_ref (1, HP), whh_ref (HP, HP), who_ref (HP, OP), bo_ref (1, OP)
#   out_ref (BP, OP) softmax output, hout_ref (BP, HP) final hidden
#   h_scratch (BP, HP) f32  cross-chunk hidden carry (persists across grid steps)
# -----------------------------------------------------------------------------
def rnn_chunk_kernel(x_ref, h0_ref, wxh_ref, bh_ref, whh_ref, who_ref, bo_ref,
                     out_ref, hout_ref, h_scratch, *, chunk, bp, seq_len, ragged):
    c = pl.program_id(0)

    @pl.when(c == 0)
    def _init():
        h_scratch[...] = h0_ref[...]

    # Fused non-recurrent input projection for the whole chunk: one big MXU matmul
    # (chunk*BP rows) instead of a tiny per-timestep one; f32 accumulation.
    xproj = jnp.dot(x_ref[...], wxh_ref[...],
                    preferred_element_type=jnp.float32) + bh_ref[...]

    # Serial recurrence. h lives in vregs as the loop carry — no per-timestep VMEM
    # store/load on the critical path. chunk <= 64 so full unrolling keeps code size sane.
    rec_dt = whh_ref.dtype
    h = h_scratch[...]
    for t in range(chunk):
        pre = xproj[t * bp:(t + 1) * bp, :] + jnp.dot(
            h.astype(rec_dt), whh_ref[...], preferred_element_type=jnp.float32)
        h_new = jnp.tanh(pre)                      # f32 transcendental (v5e-safe)
        if ragged:
            # Mask padded timesteps of the ragged last chunk with an arithmetic blend
            # (scalar-f32 * vector: always lowers cleanly, negligible cost).
            g = (c * chunk + t < seq_len).astype(jnp.float32)
            h = g * h_new + (1.0 - g) * h
        else:
            h = h_new

    h_scratch[...] = h                             # cross-chunk carry: one store per chunk

    # Output head: once, in the last grid step, outside the per-timestep loop.
    @pl.when(c == pl.num_programs(0) - 1)
    def _final():
        logits = jnp.dot(h.astype(who_ref.dtype), who_ref[...],
                         preferred_element_type=jnp.float32) + bo_ref[...]
        m = jnp.max(logits, axis=1, keepdims=True)
        e = jnp.exp(logits - m)
        denom = jnp.sum(e, axis=1, keepdims=True)
        out_ref[...] = (e / denom).astype(out_ref.dtype)   # exact normalize (runs once)
        hout_ref[...] = h.astype(hout_ref.dtype)


# -----------------------------------------------------------------------------
# One-time parameter prep (hoisted out of the per-call / per-step path).
# -----------------------------------------------------------------------------
def prepare_params(params, input_size, hidden_size, output_size,
                   matmul_dtype=jnp.bfloat16, whh_dtype=None):
    """Split cat(x,h)@W.T into x@Wxh + h@Whh, transpose to (in,out), pad feature dims to
    128 lanes, cast MXU operands.

    matmul_dtype: dtype of the large operands (Wxh, Who, and x at call time). bf16 runs the
        MXU at full rate on v5e/v6e/v7x; accumulation is always f32.
    whh_dtype: recurrent weight dtype (defaults to matmul_dtype). Keep f32 for very long
        sequences if compounded bf16 rounding in the recurrence matters.
    """
    if whh_dtype is None:
        whh_dtype = matmul_dtype
    I, H, O = input_size, hidden_size, output_size
    IP, HP, OP = _round_up(I, 128), _round_up(H, 128), _round_up(O, 128)

    w_i2h = params["w_i2h"]   # (H, I+H)  PyTorch Linear layout (out, in)
    b_i2h = params["b_i2h"]   # (H,)
    w_i2o = params["w_i2o"]   # (O, H)
    b_i2o = params["b_i2o"]   # (O,)

    wxh = jnp.transpose(w_i2h[:, :I])   # (I, H)
    whh = jnp.transpose(w_i2h[:, I:])   # (H, H)
    who = jnp.transpose(w_i2o)          # (H, O)

    # Zero padding keeps padded hidden lanes exactly 0 through the recurrence
    # (zero weight rows/cols, zero bias, tanh(0)=0).
    wxh_p = jnp.zeros((IP, HP), jnp.float32).at[:I, :H].set(wxh)
    whh_p = jnp.zeros((HP, HP), jnp.float32).at[:H, :H].set(whh)
    who_p = jnp.zeros((HP, OP), jnp.float32).at[:H, :O].set(who)
    bh_p = jnp.zeros((1, HP), jnp.float32).at[0, :H].set(b_i2h)
    # Padded logit lanes get a huge negative bias -> softmax weight exactly 0.
    bo_p = jnp.full((1, OP), -1e30, jnp.float32).at[0, :O].set(b_i2o)

    return {
        "I": I, "H": H, "O": O, "IP": IP, "HP": HP, "OP": OP,
        "wxh": wxh_p.astype(matmul_dtype),
        "whh": whh_p.astype(whh_dtype),
        "who": who_p.astype(matmul_dtype),
        "bh": bh_p,
        "bo": bo_p,
    }


# -----------------------------------------------------------------------------
# Fused sequence forward: x_seq (T, B, I), hidden0 (B, H)
#   -> (softmax output (B, O), final hidden (B, H))
# Matches looping the PyTorch forward() over the T words of a review.
# -----------------------------------------------------------------------------
def rnn_forward_sequence(x_seq, hidden0, prep, chunk=None):
    T, B, I = x_seq.shape
    H, O = prep["H"], prep["O"]
    IP, HP, OP = prep["IP"], prep["HP"], prep["OP"]
    BP = _round_up(max(B, 8), 8)

    if chunk is None:
        # One grid step per `chunk` timesteps amortizes the ~0.35 us per-grid-step overhead.
        # 64 keeps the unrolled loop small and the double-buffered x chunk tiny
        # (2 * 64*8*128*2B = 256 KiB bf16) — far under VMEM limits on v5e/v6e and on
        # v7x's smaller 64 MiB per-TC VMEM, so no vmem_limit_bytes override is needed.
        chunk = min(T, 64)
    num_chunks = pl.cdiv(T, chunk)
    T_pad = num_chunks * chunk

    in_dt = prep["wxh"].dtype
    # Pad time to a chunk multiple, batch to 8 sublanes, features to 128 lanes, then
    # flatten (time, batch) so each chunk's projection is a single big matmul.
    # NOTE: padded batch rows develop nonzero hidden values (tanh(b_h + ...)); they are
    # sliced off below and never reduced over, so this is harmless.
    x_pad = jnp.zeros((T_pad, BP, IP), in_dt).at[:T, :B, :I].set(x_seq.astype(in_dt))
    x_flat = x_pad.reshape(T_pad * BP, IP)

    h0_p = jnp.zeros((BP, HP), jnp.float32).at[:B, :H].set(hidden0.astype(jnp.float32))

    kernel = functools.partial(rnn_chunk_kernel, chunk=chunk, bp=BP,
                               seq_len=T, ragged=(T_pad != T))

    grid_spec = pltpu.PrefetchScalarGridSpec(
        num_scalar_prefetch=0,
        grid=(num_chunks,),
        in_specs=[
            pl.BlockSpec((chunk * BP, IP), lambda c: (c, 0)),  # x: one chunk per grid step
            pl.BlockSpec((BP, HP), lambda c: (0, 0)),          # h0   (resident)
            pl.BlockSpec((IP, HP), lambda c: (0, 0)),          # Wxh  (resident)
            pl.BlockSpec((1, HP), lambda c: (0, 0)),           # b_h  (resident)
            pl.BlockSpec((HP, HP), lambda c: (0, 0)),          # Whh  (resident)
            pl.BlockSpec((HP, OP), lambda c: (0, 0)),          # Who  (resident)
            pl.BlockSpec((1, OP), lambda c: (0, 0)),           # b_o  (resident)
        ],
        out_specs=(
            pl.BlockSpec((BP, OP), lambda c: (0, 0)),          # softmax out (last step)
            pl.BlockSpec((BP, HP), lambda c: (0, 0)),          # final hidden
        ),
        scratch_shapes=[pltpu.VMEM((BP, HP), jnp.float32)],    # cross-chunk hidden carry
    )

    out_p, hout_p = pl.pallas_call(
        kernel,
        out_shape=(
            jax.ShapeDtypeStruct((BP, OP), jnp.float32),
            jax.ShapeDtypeStruct((BP, HP), jnp.float32),
        ),
        grid_spec=grid_spec,
        compiler_params=pltpu.CompilerParams(
            dimension_semantics=("arbitrary",)),   # time recurrence is serial
    )(x_flat, h0_p, prep["wxh"], prep["bh"], prep["whh"], prep["who"], prep["bo"])

    return out_p[:B, :O], hout_p[:B, :H]


def rnn_forward(x, hidden, prep):
    """Single forward() step, same semantics as the PyTorch module's forward."""
    return rnn_forward_sequence(x[None, ...], hidden, prep)


def init_params(key, input_size, hidden_size=40, output_size=2):
    """Deterministic init matching the module's __init__ (normal std=0.01 weights,
    PyTorch-default uniform biases)."""
    k1, k2, k3, k4 = jax.random.split(key, 4)
    fan_h = input_size + hidden_size
    fan_o = hidden_size
    w_i2h = 0.01 * jax.random.normal(k1, (hidden_size, fan_h), jnp.float32)
    b_i2h = jax.random.uniform(k2, (hidden_size,), jnp.float32,
                               -1.0 / math.sqrt(fan_h), 1.0 / math.sqrt(fan_h))
    w_i2o = 0.01 * jax.random.normal(k3, (output_size, hidden_size), jnp.float32)
    b_i2o = jax.random.uniform(k4, (output_size,), jnp.float32,
                               -1.0 / math.sqrt(fan_o), 1.0 / math.sqrt(fan_o))
    return {"w_i2h": w_i2h, "b_i2h": b_i2h, "w_i2o": w_i2o, "b_i2o": b_i2o}


if __name__ == "__main__":
    input_size, hidden_size, output_size = 16, 40, 2
    batch, seq_len = 2, 8

    key = jax.random.PRNGKey(0)
    kp, kx = jax.random.split(key)
    params = init_params(kp, input_size, hidden_size, output_size)

    x_seq = jax.random.normal(kx, (seq_len, batch, input_size), jnp.float32)
    hidden0 = jnp.zeros((batch, hidden_size), jnp.float32)   # initHidden()

    # ---- plain-JAX reference (same math as the PyTorch forward loop) ------------
    def reference(xs, h):
        for t in range(xs.shape[0]):
            combined = jnp.concatenate([xs[t], h], axis=1)
            h = jnp.tanh(combined @ params["w_i2h"].T + params["b_i2h"])
        logits = h @ params["w_i2o"].T + params["b_i2o"]
        return jax.nn.softmax(logits, axis=1), h

    out_ref_full, hid_ref_full = reference(x_seq, hidden0)

    # ---- f32 path (strict): single grid step, fully unrolled T=8 loop -----------
    prep_f32 = prepare_params(params, input_size, hidden_size, output_size,
                              matmul_dtype=jnp.float32)
    out, hid = rnn_forward_sequence(x_seq, hidden0, prep_f32)
    jax.block_until_ready((out, hid))
    assert jnp.allclose(hid, hid_ref_full, atol=1e-5), "f32 hidden mismatch"
    assert jnp.allclose(out, out_ref_full, atol=1e-4), "f32 softmax mismatch"

    # ---- multi-chunk path (cross-chunk hidden carry through VMEM scratch) -------
    out_c, hid_c = rnn_forward_sequence(x_seq, hidden0, prep_f32, chunk=4)
    jax.block_until_ready((out_c, hid_c))
    assert jnp.allclose(hid_c, hid_ref_full, atol=1e-5), "chunked hidden mismatch"
    assert jnp.allclose(out_c, out_ref_full, atol=1e-4), "chunked softmax mismatch"

    # ---- ragged sequence (T not a multiple of chunk; masked tail timesteps) -----
    out_r_ref, hid_r_ref = reference(x_seq[:7], hidden0)
    out_r, hid_r = rnn_forward_sequence(x_seq[:7], hidden0, prep_f32, chunk=4)
    jax.block_until_ready((out_r, hid_r))
    assert jnp.allclose(hid_r, hid_r_ref, atol=1e-5), "ragged hidden mismatch"
    assert jnp.allclose(out_r, out_r_ref, atol=1e-4), "ragged softmax mismatch"

    # ---- single forward() step (matches the PyTorch module's forward) -----------
    out1, hid1 = rnn_forward(x_seq[0], hidden0, prep_f32)
    out1_ref, hid1_ref = reference(x_seq[:1], hidden0)
    assert jnp.allclose(hid1, hid1_ref, atol=1e-5), "1-step hidden mismatch"
    assert jnp.allclose(out1, out1_ref, atol=1e-4), "1-step softmax mismatch"

    # ---- default bf16 MXU-operand path (full MXU rate on v5e/v6e/v7x) -----------
    prep_bf16 = prepare_params(params, input_size, hidden_size, output_size)
    out_b, hid_b = rnn_forward_sequence(x_seq, hidden0, prep_bf16)
    jax.block_until_ready((out_b, hid_b))
    assert jnp.allclose(hid_b, hid_ref_full, atol=1e-2), "bf16 hidden mismatch"
    assert jnp.allclose(out_b, out_ref_full, atol=1e-2), "bf16 softmax mismatch"

    print("KERNEL_OK")
</pallas_src>

<mosaic_0001>
module attributes {stable_mosaic.version = 11 : i64} {
  func.func @rnn_chunk_kernel(%arg0: i32, %arg1: memref<64x128xf32, #tpu.memory_space<vmem>>, %arg2: memref<8x128xf32, #tpu.memory_space<vmem>>, %arg3: memref<128x128xf32, #tpu.memory_space<vmem>>, %arg4: memref<1x128xf32, #tpu.memory_space<vmem>>, %arg5: memref<128x128xf32, #tpu.memory_space<vmem>>, %arg6: memref<128x128xf32, #tpu.memory_space<vmem>>, %arg7: memref<1x128xf32, #tpu.memory_space<vmem>>, %arg8: memref<8x128xf32, #tpu.memory_space<vmem>>, %arg9: memref<8x128xf32, #tpu.memory_space<vmem>>, %arg10: memref<8x128xf32, #tpu.memory_space<vmem>>) attributes {dimension_semantics = [#tpu.dimension_semantics<arbitrary>], iteration_bounds = array<i64: 1>, scalar_prefetch = 0 : i64, scratch_operands = 1 : i64, tpu.core_type = #tpu.core_type<tc>, window_params = [{transform_indices = @transform_0, window_bounds = array<i64: 64, 128>}, {pipeline_mode = #tpu.pipeline_mode<synchronous>, transform_indices = @transform_1, window_bounds = array<i64: 8, 128>}, {pipeline_mode = #tpu.pipeline_mode<synchronous>, transform_indices = @transform_2, window_bounds = array<i64: 128, 128>}, {pipeline_mode = #tpu.pipeline_mode<synchronous>, transform_indices = @transform_3, window_bounds = array<i64: 1, 128>}, {pipeline_mode = #tpu.pipeline_mode<synchronous>, transform_indices = @transform_4, window_bounds = array<i64: 128, 128>}, {pipeline_mode = #tpu.pipeline_mode<synchronous>, transform_indices = @transform_5, window_bounds = array<i64: 128, 128>}, {pipeline_mode = #tpu.pipeline_mode<synchronous>, transform_indices = @transform_6, window_bounds = array<i64: 1, 128>}, {pipeline_mode = #tpu.pipeline_mode<synchronous>, transform_indices = @transform_7, window_bounds = array<i64: 8, 128>}, {pipeline_mode = #tpu.pipeline_mode<synchronous>, transform_indices = @transform_8, window_bounds = array<i64: 8, 128>}]} {
    %c0_i32 = arith.constant 0 : i32
    %0 = arith.cmpi eq, %arg0, %c0_i32 : i32
    %1 = arith.extui %0 : i1 to i32
    %c0_i32_0 = arith.constant 0 : i32
    %2 = arith.cmpi ne, %1, %c0_i32_0 : i32
    scf.if %2 {
      %c0_36 = arith.constant 0 : index
      %c0_37 = arith.constant 0 : index
      %54 = vector.load %arg2[%c0_36, %c0_37] : memref<8x128xf32, #tpu.memory_space<vmem>>, vector<8x128xf32>
      %c0_38 = arith.constant 0 : index
      %c0_39 = arith.constant 0 : index
      %55 = vector.load %arg10[%c0_38, %c0_39] : memref<8x128xf32, #tpu.memory_space<vmem>>, vector<8x128xf32>
      tpu.vector_store %arg10[%c0_38, %c0_39], %54 {strides = array<i32>} : memref<8x128xf32, #tpu.memory_space<vmem>>, vector<8x128xf32>,
    } else {
    }
    %c0 = arith.constant 0 : index
    %c0_1 = arith.constant 0 : index
    %3 = vector.load %arg1[%c0, %c0_1] : memref<64x128xf32, #tpu.memory_space<vmem>>, vector<64x128xf32>
    %c0_2 = arith.constant 0 : index
    %c0_3 = arith.constant 0 : index
    %4 = vector.load %arg3[%c0_2, %c0_3] : memref<128x128xf32, #tpu.memory_space<vmem>>, vector<128x128xf32>
    %cst = arith.constant dense<0.000000e+00> : vector<64x128xf32>
    %5 = tpu.matmul %3, %4, %cst {dimension_numbers = #tpu.dot_dimension_numbers<[1], [0], [0], [1], [0, 0, 1, 1], [], []>} : vector<64x128xf32>, vector<128x128xf32>, vector<64x128xf32> -> vector<64x128xf32>
    %c0_4 = arith.constant 0 : index
    %c0_5 = arith.constant 0 : index
    %6 = vector.load %arg4[%c0_4, %c0_5] : memref<1x128xf32, #tpu.memory_space<vmem>>, vector<1x128xf32>
    %7 = vector.broadcast %6 : vector<1x128xf32> to vector<64x128xf32>
    %8 = arith.addf %5, %7 : vector<64x128xf32>
    %c0_6 = arith.constant 0 : index
    %c0_7 = arith.constant 0 : index
    %9 = vector.load %arg10[%c0_6, %c0_7] : memref<8x128xf32, #tpu.memory_space<vmem>>, vector<8x128xf32>
    %10 = vector.extract_strided_slice %8 {offsets = [0, 0], sizes = [8, 128], strides = [1, 1]} : vector<64x128xf32> to vector<8x128xf32>
    %c0_8 = arith.constant 0 : index
    %c0_9 = arith.constant 0 : index
    %11 = vector.load %arg5[%c0_8, %c0_9] : memref<128x128xf32, #tpu.memory_space<vmem>>, vector<128x128xf32>
    %cst_10 = arith.constant dense<0.000000e+00> : vector<8x128xf32>
    %12 = tpu.matmul %9, %11, %cst_10 {dimension_numbers = #tpu.dot_dimension_numbers<[1], [0], [0], [1], [0, 0, 1, 1], [], []>} : vector<8x128xf32>, vector<128x128xf32>, vector<8x128xf32> -> vector<8x128xf32>
    %13 = arith.addf %10, %12 : vector<8x128xf32>
    %14 = math.tanh %13 : vector<8x128xf32>
    %15 = vector.extract_strided_slice %8 {offsets = [8, 0], sizes = [8, 128], strides = [1, 1]} : vector<64x128xf32> to vector<8x128xf32>
    %c0_11 = arith.constant 0 : index
    %c0_12 = arith.constant 0 : index
    %16 = vector.load %arg5[%c0_11, %c0_12] : memref<128x128xf32, #tpu.memory_space<vmem>>, vector<128x128xf32>
    %cst_13 = arith.constant dense<0.000000e+00> : vector<8x128xf32>
    %17 = tpu.matmul %14, %16, %cst_13 {dimension_numbers = #tpu.dot_dimension_numbers<[1], [0], [0], [1], [0, 0, 1, 1], [], []>} : vector<8x128xf32>, vector<128x128xf32>, vector<8x128xf32> -> vector<8x128xf32>
    %18 = arith.addf %15, %17 : vector<8x128xf32>
    %19 = math.tanh %18 : vector<8x128xf32>
    %20 = vector.extract_strided_slice %8 {offsets = [16, 0], sizes = [8, 128], strides = [1, 1]} : vector<64x128xf32> to vector<8x128xf32>
    %c0_14 = arith.constant 0 : index
    %c0_15 = arith.constant 0 : index
    %21 = vector.load %arg5[%c0_14, %c0_15] : memref<128x128xf32, #tpu.memory_space<vmem>>, vector<128x128xf32>
    %cst_16 = arith.constant dense<0.000000e+00> : vector<8x128xf32>
    %22 = tpu.matmul %19, %21, %cst_16 {dimension_numbers = #tpu.dot_dimension_numbers<[1], [0], [0], [1], [0, 0, 1, 1], [], []>} : vector<8x128xf32>, vector<128x128xf32>, vector<8x128xf32> -> vector<8x128xf32>
    %23 = arith.addf %20, %22 : vector<8x128xf32>
    %24 = math.tanh %23 : vector<8x128xf32>
    %25 = vector.extract_strided_slice %8 {offsets = [24, 0], sizes = [8, 128], strides = [1, 1]} : vector<64x128xf32> to vector<8x128xf32>
    %c0_17 = arith.constant 0 : index
    %c0_18 = arith.constant 0 : index
    %26 = vector.load %arg5[%c0_17, %c0_18] : memref<128x128xf32, #tpu.memory_space<vmem>>, vector<128x128xf32>
    %cst_19 = arith.constant dense<0.000000e+00> : vector<8x128xf32>
    %27 = tpu.matmul %24, %26, %cst_19 {dimension_numbers = #tpu.dot_dimension_numbers<[1], [0], [0], [1], [0, 0, 1, 1], [], []>} : vector<8x128xf32>, vector<128x128xf32>, vector<8x128xf32> -> vector<8x128xf32>
    %28 = arith.addf %25, %27 : vector<8x128xf32>
    %29 = math.tanh %28 : vector<8x128xf32>
    %30 = vector.extract_strided_slice %8 {offsets = [32, 0], sizes = [8, 128], strides = [1, 1]} : vector<64x128xf32> to vector<8x128xf32>
    %c0_20 = arith.constant 0 : index
    %c0_21 = arith.constant 0 : index
    %31 = vector.load %arg5[%c0_20, %c0_21] : memref<128x128xf32, #tpu.memory_space<vmem>>, vector<128x128xf32>
    %cst_22 = arith.constant dense<0.000000e+00> : vector<8x128xf32>
    %32 = tpu.matmul %29, %31, %cst_22 {dimension_numbers = #tpu.dot_dimension_numbers<[1], [0], [0], [1], [0, 0, 1, 1], [], []>} : vector<8x128xf32>, vector<128x128xf32>, vector<8x128xf32> -> vector<8x128xf32>
    %33 = arith.addf %30, %32 : vector<8x128xf32>
    %34 = math.tanh %33 : vector<8x128xf32>
    %35 = vector.extract_strided_slice %8 {offsets = [40, 0], sizes = [8, 128], strides = [1, 1]} : vector<64x128xf32> to vector<8x128xf32>
    %c0_23 = arith.constant 0 : index
    %c0_24 = arith.constant 0 : index
    %36 = vector.load %arg5[%c0_23, %c0_24] : memref<128x128xf32, #tpu.memory_space<vmem>>, vector<128x128xf32>
    %cst_25 = arith.constant dense<0.000000e+00> : vector<8x128xf32>
    %37 = tpu.matmul %34, %36, %cst_25 {dimension_numbers = #tpu.dot_dimension_numbers<[1], [0], [0], [1], [0, 0, 1, 1], [], []>} : vector<8x128xf32>, vector<128x128xf32>, vector<8x128xf32> -> vector<8x128xf32>
    %38 = arith.addf %35, %37 : vector<8x128xf32>
    %39 = math.tanh %38 : vector<8x128xf32>
    %40 = vector.extract_strided_slice %8 {offsets = [48, 0], sizes = [8, 128], strides = [1, 1]} : vector<64x128xf32> to vector<8x128xf32>
    %c0_26 = arith.constant 0 : index
    %c0_27 = arith.constant 0 : index
    %41 = vector.load %arg5[%c0_26, %c0_27] : memref<128x128xf32, #tpu.memory_space<vmem>>, vector<128x128xf32>
    %cst_28 = arith.constant dense<0.000000e+00> : vector<8x128xf32>
    %42 = tpu.matmul %39, %41, %cst_28 {dimension_numbers = #tpu.dot_dimension_numbers<[1], [0], [0], [1], [0, 0, 1, 1], [], []>} : vector<8x128xf32>, vector<128x128xf32>, vector<8x128xf32> -> vector<8x128xf32>
    %43 = arith.addf %40, %42 : vector<8x128xf32>
    %44 = math.tanh %43 : vector<8x128xf32>
    %45 = vector.extract_strided_slice %8 {offsets = [56, 0], sizes = [8, 128], strides = [1, 1]} : vector<64x128xf32> to vector<8x128xf32>
    %c0_29 = arith.constant 0 : index
    %c0_30 = arith.constant 0 : index
    %46 = vector.load %arg5[%c0_29, %c0_30] : memref<128x128xf32, #tpu.memory_space<vmem>>, vector<128x128xf32>
    %cst_31 = arith.constant dense<0.000000e+00> : vector<8x128xf32>
    %47 = tpu.matmul %44, %46, %cst_31 {dimension_numbers = #tpu.dot_dimension_numbers<[1], [0], [0], [1], [0, 0, 1, 1], [], []>} : vector<8x128xf32>, vector<128x128xf32>, vector<8x128xf32> -> vector<8x128xf32>
    %48 = arith.addf %45, %47 : vector<8x128xf32>
    %49 = math.tanh %48 : vector<8x128xf32>
    %c0_32 = arith.constant 0 : index
    %c0_33 = arith.constant 0 : index
    %50 = vector.load %arg10[%c0_32, %c0_33] : memref<8x128xf32, #tpu.memory_space<vmem>>, vector<8x128xf32>
    tpu.vector_store %arg10[%c0_32, %c0_33], %49 {strides = array<i32>} : memref<8x128xf32, #tpu.memory_space<vmem>>, vector<8x128xf32>,
    %c0_i32_34 = arith.constant 0 : i32
    %51 = arith.cmpi eq, %arg0, %c0_i32_34 : i32
    %52 = arith.extui %51 : i1 to i32
    %c0_i32_35 = arith.constant 0 : i32
    %53 = arith.cmpi ne, %52, %c0_i32_35 : i32
    scf.if %53 {
      %c0_36 = arith.constant 0 : index
      %c0_37 = arith.constant 0 : index
      %54 = vector.load %arg6[%c0_36, %c0_37] : memref<128x128xf32, #tpu.memory_space<vmem>>, vector<128x128xf32>
      %cst_38 = arith.constant dense<0.000000e+00> : vector<8x128xf32>
      %55 = tpu.matmul %49, %54, %cst_38 {dimension_numbers = #tpu.dot_dimension_numbers<[1], [0], [0], [1], [0, 0, 1, 1], [], []>} : vector<8x128xf32>, vector<128x128xf32>, vector<8x128xf32> -> vector<8x128xf32>
      %c0_39 = arith.constant 0 : index
      %c0_40 = arith.constant 0 : index
      %56 = vector.load %arg7[%c0_39, %c0_40] : memref<1x128xf32, #tpu.memory_space<vmem>>, vector<1x128xf32>
      %57 = vector.broadcast %56 : vector<1x128xf32> to vector<8x128xf32>
      %58 = arith.addf %55, %57 : vector<8x128xf32>
      %cst_41 = arith.constant dense<0xFF800000> : vector<8xf32>
      %59 = vector.multi_reduction <maximumf>, %58, %cst_41 [1] : vector<8x128xf32> to vector<8xf32>
      %60 = vector.shape_cast %59 : vector<8xf32> to vector<8x1xf32>
      %61 = vector.broadcast %60 : vector<8x1xf32> to vector<8x128xf32>
      %62 = arith.subf %58, %61 : vector<8x128xf32>
      %63 = math.exp %62 : vector<8x128xf32>
      %cst_42 = arith.constant dense<0.000000e+00> : vector<8xf32>
      %64 = vector.multi_reduction <add>, %63, %cst_42 [1] : vector<8x128xf32> to vector<8xf32>
      %65 = vector.shape_cast %64 : vector<8xf32> to vector<8x1xf32>
      %66 = vector.broadcast %65 : vector<8x1xf32> to vector<8x128xf32>
      %67 = arith.divf %63, %66 : vector<8x128xf32>
      %c0_43 = arith.constant 0 : index
      %c0_44 = arith.constant 0 : index
      %68 = vector.load %arg8[%c0_43, %c0_44] : memref<8x128xf32, #tpu.memory_space<vmem>>, vector<8x128xf32>
      tpu.vector_store %arg8[%c0_43, %c0_44], %67 {strides = array<i32>} : memref<8x128xf32, #tpu.memory_space<vmem>>, vector<8x128xf32>,
      %c0_45 = arith.constant 0 : index
      %c0_46 = arith.constant 0 : index
      %69 = vector.load %arg9[%c0_45, %c0_46] : memref<8x128xf32, #tpu.memory_space<vmem>>, vector<8x128xf32>
      tpu.vector_store %arg9[%c0_45, %c0_46], %49 {strides = array<i32>} : memref<8x128xf32, #tpu.memory_space<vmem>>, vector<8x128xf32>,
    } else {
    }
    return
  }
  func.func @transform_0(%arg0: i32) -> (i32, i32) {
    %c0_i32 = arith.constant 0 : i32
    %c0_i32_0 = arith.constant 0 : i32
    return %arg0, %c0_i32 : i32, i32
  }
  func.func @transform_1(%arg0: i32) -> (i32, i32) {
    %c0_i32 = arith.constant 0 : i32
    %c0_i32_0 = arith.constant 0 : i32
    %c0_i32_1 = arith.constant 0 : i32
    return %c0_i32, %c0_i32_0 : i32, i32
  }
  func.func @transform_2(%arg0: i32) -> (i32, i32) {
    %c0_i32 = arith.constant 0 : i32
    %c0_i32_0 = arith.constant 0 : i32
    %c0_i32_1 = arith.constant 0 : i32
    return %c0_i32, %c0_i32_0 : i32, i32
  }
  func.func @transform_3(%arg0: i32) -> (i32, i32) {
    %c0_i32 = arith.constant 0 : i32
    %c0_i32_0 = arith.constant 0 : i32
    %c0_i32_1 = arith.constant 0 : i32
    return %c0_i32, %c0_i32_0 : i32, i32
  }
  func.func @transform_4(%arg0: i32) -> (i32, i32) {
    %c0_i32 = arith.constant 0 : i32
    %c0_i32_0 = arith.constant 0 : i32
    %c0_i32_1 = arith.constant 0 : i32
    return %c0_i32, %c0_i32_0 : i32, i32
  }
  func.func @transform_5(%arg0: i32) -> (i32, i32) {
    %c0_i32 = arith.constant 0 : i32
    %c0_i32_0 = arith.constant 0 : i32
    %c0_i32_1 = arith.constant 0 : i32
    return %c0_i32, %c0_i32_0 : i32, i32
  }
  func.func @transform_6(%arg0: i32) -> (i32, i32) {
    %c0_i32 = arith.constant 0 : i32
    %c0_i32_0 = arith.constant 0 : i32
    %c0_i32_1 = arith.constant 0 : i32
    return %c0_i32, %c0_i32_0 : i32, i32
  }
  func.func @transform_7(%arg0: i32) -> (i32, i32) {
    %c0_i32 = arith.constant 0 : i32
    %c0_i32_0 = arith.constant 0 : i32
    %c0_i32_1 = arith.constant 0 : i32
    return %c0_i32, %c0_i32_0 : i32, i32
  }
  func.func @transform_8(%arg0: i32) -> (i32, i32) {
    %c0_i32 = arith.constant 0 : i32
    %c0_i32_0 = arith.constant 0 : i32
    %c0_i32_1 = arith.constant 0 : i32
    return %c0_i32, %c0_i32_0 : i32, i32
  }
}

</mosaic_0001>

<llo_original>
// kernel: tpu_custom_call.1
$region0: #{tpu_custom_call.1}
  #allocation0 [shape = 'u32[]', space=smem, size = 0x4, offset = 0x4, fixed_abs, tag = 'smem constant byte address 0x4 - core index']
  #allocation1 [shape = 'u32[144,128]{1,0:T(1,128)}', space=vmem, size = 0x12000, scoped, tag = 'internal scratch']
  #allocation2 [shape = 'f32[8,128]{1,0:T(8,128)}', space=vmem, size = 0x1000, scoped, tag = 'scratch operand']
  %s0 = inlined_call_operand.hbm [shape: f32[64,128], index: 0, kind: input, shape index: {}]
  %s1 = inlined_call_operand.hbm [shape: f32[8,128], index: 1, kind: input, shape index: {}]
  %s2 = inlined_call_operand.hbm [shape: f32[128,128], index: 2, kind: input, shape index: {}]
  %s3 = inlined_call_operand.vmem [shape: f32[1,128], index: 3, kind: input, shape index: {}]
  %s4 = inlined_call_operand.hbm [shape: f32[128,128], index: 4, kind: input, shape index: {}]
  %s5 = inlined_call_operand.hbm [shape: f32[128,128], index: 5, kind: input, shape index: {}]
  %s6 = inlined_call_operand.vmem [shape: f32[1,128], index: 6, kind: input, shape index: {}]
  %s7 = inlined_call_operand.hbm [shape: f32[8,128], index: 7, kind: output, shape index: {0}]
  %s8 = inlined_call_operand.hbm [shape: f32[8,128], index: 8, kind: output, shape index: {1}]
  %9 = xla_tuple %s7, %s8
  %s10 = sld [smem:[#allocation0]]
  $region74: #{tpu_custom_call.1} parent=0
    _
  %s12 = ssub.s32 1, %s10
  %s13 = scalar_select 0, %s12, %s10
  $region1: #{tpu_custom_call.1} parent=0
    #allocation3 [shape = 'u8[32768]{0}', space=vmem, size = 0x8000, scoped, tag = 'input window, operand 0, single buffered']
    #allocation4 [shape = 's32[1]{0}', space=sflag, size = 0x4, scoped, tag = 'scoped memory for tpu_custom_call.1']
    #allocation5 [shape = 's32[1]{0}', space=sflag, size = 0x4, scoped, tag = 'scoped memory for tpu_custom_call.1']
    #allocation6 [shape = 'u8[4096]{0}', space=vmem, size = 0x1000, scoped, tag = 'input window, operand 1, single buffered']
    #allocation7 [shape = 's32[1]{0}', space=sflag, size = 0x4, scoped, tag = 'scoped memory for tpu_custom_call.1']
    #allocation8 [shape = 'u8[65536]{0}', space=vmem, size = 0x10000, scoped, tag = 'input window, operand 2, single buffered']
    #allocation9 [shape = 'u8[65536]{0}', space=vmem, size = 0x10000, scoped, tag = 'input window, operand 4, single buffered']
    #allocation10 [shape = 's32[1]{0}', space=sflag, size = 0x4, scoped, tag = 'scoped memory for tpu_custom_call.1']
    #allocation11 [shape = 'u8[65536]{0}', space=vmem, size = 0x10000, scoped, tag = 'input window, operand 5, single buffered']
    #allocation12 [shape = 'u8[4096]{0}', space=vmem, size = 0x1000, scoped, tag = 'output window, operand 0, single buffered']
    #allocation13 [shape = 'u8[4096]{0}', space=vmem, size = 0x1000, scoped, tag = 'output window, operand 1, single buffered']
    #allocation14 [shape = 's32[1]{0}', space=sflag, size = 0x4, scoped, tag = 'scoped memory for tpu_custom_call.1']
    %14 = vsyncpa [#allocation4], 0
    %15 = vsyncpa [#allocation7], 0
    %16 = vsyncpa [#allocation10], 0
    %17 = vsyncpa [#allocation5], 0
    %18 = vsyncpa [#allocation14], 0
    // Predicated region
    $region2: #{tpu_custom_call.1} parent=1 // pred_check
      _
    $region3: #{tpu_custom_call.1} parent=1 // pred_check_branch
      %20 = sbr.rel (0) target = $region5
    $region4: #{tpu_custom_call.1} parent=1 // pred_region
      %s22 = ssub.s32 1024, 1024
      %23 = vsyncadd [#allocation4], %s22
      %s24 = sshll.u32 [#allocation3], 4
      %s25 = int_to_ptr.vmem [resolvable:$true] %s24
      %30 = dma.hbm_to_vmem [thread:$0]  %s0, 1024, %s25, [#allocation4], 128, 128, 8
    $region5: #{tpu_custom_call.1} parent=1 // pred_fallthru
      _
    // Predicated region
    $region6: #{tpu_custom_call.1} parent=1 // pred_check
      _
    $region7: #{tpu_custom_call.1} parent=1 // pred_check_branch
      %32 = sbr.rel (0) target = $region9
    $region8: #{tpu_custom_call.1} parent=1 // pred_region
      %s34 = ssub.s32 128, 128
      %35 = vsyncadd [#allocation7], %s34
      %s37 = sshll.u32 [#allocation6], 4
      %s38 = int_to_ptr.vmem [resolvable:$true] %s37
      %40 = dma.hbm_to_vmem [thread:$0]  %s1, 128, %s38, [#allocation7]
    $region9: #{tpu_custom_call.1} parent=1 // pred_fallthru
      _
    // Predicated region
    $region10: #{tpu_custom_call.1} parent=1 // pred_check
      _
    $region11: #{tpu_custom_call.1} parent=1 // pred_check_branch
      %42 = sbr.rel (0) target = $region13
    $region12: #{tpu_custom_call.1} parent=1 // pred_region
      %s44 = ssub.s32 2048, 2048
      %45 = vsyncadd [#allocation7], %s44
      %s46 = sshll.u32 [#allocation8], 4
      %s47 = int_to_ptr.vmem [resolvable:$true] %s46
      %52 = dma.hbm_to_vmem [thread:$0]  %s2, 2048, %s47, [#allocation7], 128, 128, 8
    $region13: #{tpu_custom_call.1} parent=1 // pred_fallthru
      _
    // Predicated region
    $region14: #{tpu_custom_call.1} parent=1 // pred_check
      _
    $region15: #{tpu_custom_call.1} parent=1 // pred_check_branch
      %54 = sbr.rel (0) target = $region17
    $region16: #{tpu_custom_call.1} parent=1 // pred_region
      _
    $region17: #{tpu_custom_call.1} parent=1 // pred_fallthru
      _
    // Predicated region
    $region18: #{tpu_custom_call.1} parent=1 // pred_check
      _
    $region19: #{tpu_custom_call.1} parent=1 // pred_check_branch
      %56 = sbr.rel (0) target = $region21
    $region20: #{tpu_custom_call.1} parent=1 // pred_region
      %s58 = ssub.s32 2048, 2048
      %59 = vsyncadd [#allocation10], %s58
      %s60 = sshll.u32 [#allocation9], 4
      %s61 = int_to_ptr.vmem [resolvable:$true] %s60
      %66 = dma.hbm_to_vmem [thread:$0]  %s4, 2048, %s61, [#allocation10], 128, 128, 8
    $region21: #{tpu_custom_call.1} parent=1 // pred_fallthru
      _
    // Predicated region
    $region22: #{tpu_custom_call.1} parent=1 // pred_check
      _
    $region23: #{tpu_custom_call.1} parent=1 // pred_check_branch
      %68 = sbr.rel (0) target = $region25
    $region24: #{tpu_custom_call.1} parent=1 // pred_region
      %s70 = ssub.s32 2048, 2048
      %71 = vsyncadd [#allocation10], %s70
      %s72 = sshll.u32 [#allocation11], 4
      %s73 = int_to_ptr.vmem [resolvable:$true] %s72
      %78 = dma.hbm_to_vmem [thread:$0]  %s5, 2048, %s73, [#allocation10], 128, 128, 8
    $region25: #{tpu_custom_call.1} parent=1 // pred_fallthru
      _
    // Predicated region
    $region26: #{tpu_custom_call.1} parent=1 // pred_check
      _
    $region27: #{tpu_custom_call.1} parent=1 // pred_check_branch
      %80 = sbr.rel (0) target = $region29
    $region28: #{tpu_custom_call.1} parent=1 // pred_region
      _
    $region29: #{tpu_custom_call.1} parent=1 // pred_fallthru
      _
    // Predicated region
    $region30: #{tpu_custom_call.1} parent=1 // pred_check
      _
    $region31: #{tpu_custom_call.1} parent=1 // pred_check_branch
      %82 = sbr.rel (0) target = $region33
    $region32: #{tpu_custom_call.1} parent=1 // pred_region
      %83 = dma.done [#allocation4], 1024
    $region33: #{tpu_custom_call.1} parent=1 // pred_fallthru
      _
    // Predicated region
    $region34: #{tpu_custom_call.1} parent=1 // pred_check
      _
    $region35: #{tpu_custom_call.1} parent=1 // pred_check_branch
      %85 = sbr.rel (0) target = $region37
    $region36: #{tpu_custom_call.1} parent=1 // pred_region
      %86 = dma.done [#allocation7], 128
    $region37: #{tpu_custom_call.1} parent=1 // pred_fallthru
      _
    // Predicated region
    $region38: #{tpu_custom_call.1} parent=1 // pred_check
      _
    $region39: #{tpu_custom_call.1} parent=1 // pred_check_branch
      %88 = sbr.rel (0) target = $region41
    $region40: #{tpu_custom_call.1} parent=1 // pred_region
      %89 = dma.done [#allocation7], 2048
    $region41: #{tpu_custom_call.1} parent=1 // pred_fallthru
      _
    // Predicated region
    $region42: #{tpu_custom_call.1} parent=1 // pred_check
      _
    $region43: #{tpu_custom_call.1} parent=1 // pred_check_branch
      %91 = sbr.rel (0) target = $region45
    $region44: #{tpu_custom_call.1} parent=1 // pred_region
      %92 = dma.done [#allocation10], 2048
    $region45: #{tpu_custom_call.1} parent=1 // pred_fallthru
      _
    // Predicated region
    $region46: #{tpu_custom_call.1} parent=1 // pred_check
      _
    $region47: #{tpu_custom_call.1} parent=1 // pred_check_branch
      %94 = sbr.rel (0) target = $region49
    $region48: #{tpu_custom_call.1} parent=1 // pred_region
      %95 = dma.done [#allocation10], 2048
    $region49: #{tpu_custom_call.1} parent=1 // pred_fallthru
      _
    %p96 = scmp.eq.s32.totalorder 0, 0
    // Predicated region
    $region50: #{tpu_custom_call.1} parent=1 // pred_check
      %p97 = pneg %p96
    $region51: #{tpu_custom_call.1} parent=1 // pred_check_branch
      %99 = sbr.rel (%p97) target = $region53
    $region52: #{tpu_custom_call.1} parent=1 // pred_region
      %v100 = vld [vmem:[#allocation6] sm:$0xff]
      %101 = vst [vmem:[#allocation2] sm:$0xff] %v100
    $region53: #{tpu_custom_call.1} parent=1 // pred_fallthru
      _
    %v102 = vld [vmem:[#allocation3] sm:$0xff]
    %v103 = vld [vmem:[#allocation3 + $0x8] sm:$0xff]
    %v104 = vld [vmem:[#allocation3 + $0x10] sm:$0xff]
    %v105 = vld [vmem:[#allocation3 + $0x18] sm:$0xff]
    %v106 = vld [vmem:[#allocation3 + $0x20] sm:$0xff]
    %v107 = vld [vmem:[#allocation3 + $0x28] sm:$0xff]
    %v108 = vld [vmem:[#allocation3 + $0x30] sm:$0xff]
    %v109 = vld [vmem:[#allocation3 + $0x38] sm:$0xff]
    %v110 = vld [vmem:[#allocation8] sm:$0xff]
    %v111 = vld [vmem:[#allocation8 + $0x8] sm:$0xff]
    %v112 = vld [vmem:[#allocation8 + $0x10] sm:$0xff]
    %v113 = vld [vmem:[#allocation8 + $0x18] sm:$0xff]
    %v114 = vld [vmem:[#allocation8 + $0x20] sm:$0xff]
    %v115 = vld [vmem:[#allocation8 + $0x28] sm:$0xff]
    %v116 = vld [vmem:[#allocation8 + $0x30] sm:$0xff]
    %v117 = vld [vmem:[#allocation8 + $0x38] sm:$0xff]
    %v118 = vld [vmem:[#allocation8 + $0x40] sm:$0xff]
    %v119 = vld [vmem:[#allocation8 + $0x48] sm:$0xff]
    %v120 = vld [vmem:[#allocation8 + $0x50] sm:$0xff]
    %v121 = vld [vmem:[#allocation8 + $0x58] sm:$0xff]
    %v122 = vld [vmem:[#allocation8 + $0x60] sm:$0xff]
    %v123 = vld [vmem:[#allocation8 + $0x68] sm:$0xff]
    %v124 = vld [vmem:[#allocation8 + $0x70] sm:$0xff]
    %v125 = vld [vmem:[#allocation8 + $0x78] sm:$0xff]
    %v126 = vld [vmem:[%s3] sm:$0x1]
    %v128 = vlaneseq
    %v129 = vshrl.u32 %v128, 7
    %v130 = vsub.s32 0, %v129
    %v131 = vrot.slane %v126, %v130
    %133 = vmatprep.subr.mxu0 0.0
    %134 = vmatpush1.msra.mxu0 %v125
    %135 = vmatprep.subr.mxu0 0.0
    %136 = vmatpush1.msra.mxu0 %v124
    %137 = vmatprep.subr.mxu0 0.0
    %138 = vmatpush1.msra.mxu0 %v123
    %139 = vmatprep.subr.mxu0 0.0
    %140 = vmatpush1.msra.mxu0 %v122
    %141 = vmatprep.subr.mxu0 0.0
    %142 = vmatpush1.msra.mxu0 %v121
    %143 = vmatprep.subr.mxu0 0.0
    %144 = vmatpush1.msra.mxu0 %v120
    %145 = vmatprep.subr.mxu0 0.0
    %146 = vmatpush1.msra.mxu0 %v119
    %147 = vmatprep.subr.mxu0 0.0
    %148 = vmatpush1.msra.mxu0 %v118
    %149 = vmatprep.subr.mxu0 0.0
    %150 = vmatpush1.msra.mxu0 %v117
    %151 = vmatprep.subr.mxu0 0.0
    %152 = vmatpush1.msra.mxu0 %v116
    %153 = vmatprep.subr.mxu0 0.0
    %154 = vmatpush1.msra.mxu0 %v115
    %155 = vmatprep.subr.mxu0 0.0
    %156 = vmatpush1.msra.mxu0 %v114
    %157 = vmatprep.subr.mxu0 0.0
    %158 = vmatpush1.msra.mxu0 %v113
    %159 = vmatprep.subr.mxu0 0.0
    %160 = vmatpush1.msra.mxu0 %v112
    %161 = vmatprep.subr.mxu0 0.0
    %162 = vmatpush1.msra.mxu0 %v111
    %163 = vmatprep.subr.mxu0 0.0
    %164 = vmatpush1.msra.mxu0 %v110
    %165 = vmatprep.subr.mxu0 0.0
    %166 = vmatpush2.msra.mxu0 0.0
    %167 = vmatprep.subr.mxu0 0.0
    %168 = vmatpush2.msra.mxu0 0.0
    %169 = vmatprep.subr.mxu0 0.0
    %170 = vmatpush2.msra.mxu0 0.0
    %171 = vmatprep.subr.mxu0 0.0
    %172 = vmatpush2.msra.mxu0 0.0
    %173 = vmatprep.subr.mxu0 0.0
    %174 = vmatpush2.msra.mxu0 0.0
    %175 = vmatprep.subr.mxu0 0.0
    %176 = vmatpush2.msra.mxu0 0.0
    %177 = vmatprep.subr.mxu0 0.0
    %178 = vmatpush2.msra.mxu0 0.0
    %179 = vmatprep.subr.mxu0 0.0
    %180 = vmatpush2.msra.mxu0 0.0
    %181 = vmatprep.subr.mxu0 0.0
    %182 = vmatpush2.msra.mxu0 0.0
    %183 = vmatprep.subr.mxu0 0.0
    %184 = vmatpush2.msra.mxu0 0.0
    %185 = vmatprep.subr.mxu0 0.0
    %186 = vmatpush2.msra.mxu0 0.0
    %187 = vmatprep.subr.mxu0 0.0
    %188 = vmatpush2.msra.mxu0 0.0
    %189 = vmatprep.subr.mxu0 0.0
    %190 = vmatpush2.msra.mxu0 0.0
    %191 = vmatprep.subr.mxu0 0.0
    %192 = vmatpush2.msra.mxu0 0.0
    %193 = vmatprep.subr.mxu0 0.0
    %194 = vmatpush2.msra.mxu0 0.0
    %195 = vmatprep.subr.mxu0 0.0
    %196 = vmatpush2.msra.mxu0 0.0
    %197 = vmatprep.mubr.f32.mxu0 0.0
    %198 = vmatmul.mubr.f32.gmra.mxu0 %v102
    %v199 = vpop.f32.mrf.mxu0
    %v200 = vadd.f32 %v131, %v199
    %v201 = vpop.f32.mrf.mxu0
    %202 = vmatprep.mubr.f32.mxu0 0.0
    %203 = vmatmul.mubr.f32.gmra.mxu0 %v103
    %v204 = vpop.f32.mrf.mxu0
    %v205 = vadd.f32 %v131, %v204
    %v206 = vpop.f32.mrf.mxu0
    %207 = vmatprep.mubr.f32.mxu0 0.0
    %208 = vmatmul.mubr.f32.gmra.mxu0 %v104
    %v209 = vpop.f32.mrf.mxu0
    %v210 = vadd.f32 %v131, %v209
    %v211 = vpop.f32.mrf.mxu0
    %212 = vmatprep.mubr.f32.mxu0 0.0
    %213 = vmatmul.mubr.f32.gmra.mxu0 %v105
    %v214 = vpop.f32.mrf.mxu0
    %v215 = vadd.f32 %v131, %v214
    %v216 = vpop.f32.mrf.mxu0
    %217 = vmatprep.mubr.f32.mxu0 0.0
    %218 = vmatmul.mubr.f32.gmra.mxu0 %v106
    %v219 = vpop.f32.mrf.mxu0
    %v220 = vadd.f32 %v131, %v219
    %v221 = vpop.f32.mrf.mxu0
    %222 = vmatprep.mubr.f32.mxu0 0.0
    %223 = vmatmul.mubr.f32.gmra.mxu0 %v107
    %v224 = vpop.f32.mrf.mxu0
    %v225 = vadd.f32 %v131, %v224
    %v226 = vpop.f32.mrf.mxu0
    %227 = vmatprep.mubr.f32.mxu0 0.0
    %228 = vmatmul.mubr.f32.gmra.mxu0 %v108
    %v229 = vpop.f32.mrf.mxu0
    %v230 = vadd.f32 %v131, %v229
    %v231 = vpop.f32.mrf.mxu0
    %232 = vmatprep.mubr.f32.mxu0 0.0
    %233 = vmatmul.mubr.f32.gmra.mxu0 %v109
    %v234 = vpop.f32.mrf.mxu0
    %v235 = vadd.f32 %v131, %v234
    %v236 = vpop.f32.mrf.mxu0
    %237 = vdwg.mxu0
    %v238 = vld [vmem:[#allocation2] sm:$0xff]
    %v239 = vld [vmem:[#allocation9] sm:$0xff]
    %v240 = vld [vmem:[#allocation9 + $0x8] sm:$0xff]
    %v241 = vld [vmem:[#allocation9 + $0x10] sm:$0xff]
    %v242 = vld [vmem:[#allocation9 + $0x18] sm:$0xff]
    %v243 = vld [vmem:[#allocation9 + $0x20] sm:$0xff]
    %v244 = vld [vmem:[#allocation9 + $0x28] sm:$0xff]
    %v245 = vld [vmem:[#allocation9 + $0x30] sm:$0xff]
    %v246 = vld [vmem:[#allocation9 + $0x38] sm:$0xff]
    %v247 = vld [vmem:[#allocation9 + $0x40] sm:$0xff]
    %v248 = vld [vmem:[#allocation9 + $0x48] sm:$0xff]
    %v249 = vld [vmem:[#allocation9 + $0x50] sm:$0xff]
    %v250 = vld [vmem:[#allocation9 + $0x58] sm:$0xff]
    %v251 = vld [vmem:[#allocation9 + $0x60] sm:$0xff]
    %v252 = vld [vmem:[#allocation9 + $0x68] sm:$0xff]
    %v253 = vld [vmem:[#allocation9 + $0x70] sm:$0xff]
    %v254 = vld [vmem:[#allocation9 + $0x78] sm:$0xff]
    %255 = vmatprep.subr.mxu0 0.0
    %256 = vmatpush1.msra.mxu0 %v254
    %257 = vmatprep.subr.mxu0 0.0
    %258 = vmatpush1.msra.mxu0 %v253
    %259 = vmatprep.subr.mxu0 0.0
    %260 = vmatpush1.msra.mxu0 %v252
    %261 = vmatprep.subr.mxu0 0.0
    %262 = vmatpush1.msra.mxu0 %v251
    %263 = vmatprep.subr.mxu0 0.0
    %264 = vmatpush1.msra.mxu0 %v250
    %265 = vmatprep.subr.mxu0 0.0
    %266 = vmatpush1.msra.mxu0 %v249
    %267 = vmatprep.subr.mxu0 0.0
    %268 = vmatpush1.msra.mxu0 %v248
    %269 = vmatprep.subr.mxu0 0.0
    %270 = vmatpush1.msra.mxu0 %v247
    %271 = vmatprep.subr.mxu0 0.0
    %272 = vmatpush1.msra.mxu0 %v246
    %273 = vmatprep.subr.mxu0 0.0
    %274 = vmatpush1.msra.mxu0 %v245
    %275 = vmatprep.subr.mxu0 0.0
    %276 = vmatpush1.msra.mxu0 %v244
    %277 = vmatprep.subr.mxu0 0.0
    %278 = vmatpush1.msra.mxu0 %v243
    %279 = vmatprep.subr.mxu0 0.0
    %280 = vmatpush1.msra.mxu0 %v242
    %281 = vmatprep.subr.mxu0 0.0
    %282 = vmatpush1.msra.mxu0 %v241
    %283 = vmatprep.subr.mxu0 0.0
    %284 = vmatpush1.msra.mxu0 %v240
    %285 = vmatprep.subr.mxu0 0.0
    %286 = vmatpush1.msra.mxu0 %v239
    %287 = vmatprep.subr.mxu0 0.0
    %288 = vmatpush2.msra.mxu0 0.0
    %289 = vmatprep.subr.mxu0 0.0
    %290 = vmatpush2.msra.mxu0 0.0
    %291 = vmatprep.subr.mxu0 0.0
    %292 = vmatpush2.msra.mxu0 0.0
    %293 = vmatprep.subr.mxu0 0.0
    %294 = vmatpush2.msra.mxu0 0.0
    %295 = vmatprep.subr.mxu0 0.0
    %296 = vmatpush2.msra.mxu0 0.0
    %297 = vmatprep.subr.mxu0 0.0
    %298 = vmatpush2.msra.mxu0 0.0
    %299 = vmatprep.subr.mxu0 0.0
    %300 = vmatpush2.msra.mxu0 0.0
    %301 = vmatprep.subr.mxu0 0.0
    %302 = vmatpush2.msra.mxu0 0.0
    %303 = vmatprep.subr.mxu0 0.0
    %304 = vmatpush2.msra.mxu0 0.0
    %305 = vmatprep.subr.mxu0 0.0
    %306 = vmatpush2.msra.mxu0 0.0
    %307 = vmatprep.subr.mxu0 0.0
    %308 = vmatpush2.msra.mxu0 0.0
    %309 = vmatprep.subr.mxu0 0.0
    %310 = vmatpush2.msra.mxu0 0.0
    %311 = vmatprep.subr.mxu0 0.0
    %312 = vmatpush2.msra.mxu0 0.0
    %313 = vmatprep.subr.mxu0 0.0
    %314 = vmatpush2.msra.mxu0 0.0
    %315 = vmatprep.subr.mxu0 0.0
    %316 = vmatpush2.msra.mxu0 0.0
    %317 = vmatprep.subr.mxu0 0.0
    %318 = vmatpush2.msra.mxu0 0.0
    %319 = vmatprep.mubr.f32.mxu0 0.0
    %320 = vmatmul.mubr.f32.gmra.mxu0 %v238
    %v321 = vpop.f32.mrf.mxu0
    %v322 = vadd.f32 0.0, %v321
    %v323 = vpop.f32.mrf.mxu0
    %324 = vdwg.mxu0
    %v325 = vadd.f32 %v200, %v322
    %v326 = vtanh.pop %v325
    %327 = vmatprep.subr.mxu0 0.0
    %328 = vmatpush1.msra.mxu0 %v254
    %329 = vmatprep.subr.mxu0 0.0
    %330 = vmatpush1.msra.mxu0 %v253
    %331 = vmatprep.subr.mxu0 0.0
    %332 = vmatpush1.msra.mxu0 %v252
    %333 = vmatprep.subr.mxu0 0.0
    %334 = vmatpush1.msra.mxu0 %v251
    %335 = vmatprep.subr.mxu0 0.0
    %336 = vmatpush1.msra.mxu0 %v250
    %337 = vmatprep.subr.mxu0 0.0
    %338 = vmatpush1.msra.mxu0 %v249
    %339 = vmatprep.subr.mxu0 0.0
    %340 = vmatpush1.msra.mxu0 %v248
    %341 = vmatprep.subr.mxu0 0.0
    %342 = vmatpush1.msra.mxu0 %v247
    %343 = vmatprep.subr.mxu0 0.0
    %344 = vmatpush1.msra.mxu0 %v246
    %345 = vmatprep.subr.mxu0 0.0
    %346 = vmatpush1.msra.mxu0 %v245
    %347 = vmatprep.subr.mxu0 0.0
    %348 = vmatpush1.msra.mxu0 %v244
    %349 = vmatprep.subr.mxu0 0.0
    %350 = vmatpush1.msra.mxu0 %v243
    %351 = vmatprep.subr.mxu0 0.0
    %352 = vmatpush1.msra.mxu0 %v242
    %353 = vmatprep.subr.mxu0 0.0
    %354 = vmatpush1.msra.mxu0 %v241
    %355 = vmatprep.subr.mxu0 0.0
    %356 = vmatpush1.msra.mxu0 %v240
    %357 = vmatprep.subr.mxu0 0.0
    %358 = vmatpush1.msra.mxu0 %v239
    %359 = vmatprep.subr.mxu0 0.0
    %360 = vmatpush2.msra.mxu0 0.0
    %361 = vmatprep.subr.mxu0 0.0
    %362 = vmatpush2.msra.mxu0 0.0
    %363 = vmatprep.subr.mxu0 0.0
    %364 = vmatpush2.msra.mxu0 0.0
    %365 = vmatprep.subr.mxu0 0.0
    %366 = vmatpush2.msra.mxu0 0.0
    %367 = vmatprep.subr.mxu0 0.0
    %368 = vmatpush2.msra.mxu0 0.0
    %369 = vmatprep.subr.mxu0 0.0
    %370 = vmatpush2.msra.mxu0 0.0
    %371 = vmatprep.subr.mxu0 0.0
    %372 = vmatpush2.msra.mxu0 0.0
    %373 = vmatprep.subr.mxu0 0.0
    %374 = vmatpush2.msra.mxu0 0.0
    %375 = vmatprep.subr.mxu0 0.0
    %376 = vmatpush2.msra.mxu0 0.0
    %377 = vmatprep.subr.mxu0 0.0
    %378 = vmatpush2.msra.mxu0 0.0
    %379 = vmatprep.subr.mxu0 0.0
    %380 = vmatpush2.msra.mxu0 0.0
    %381 = vmatprep.subr.mxu0 0.0
    %382 = vmatpush2.msra.mxu0 0.0
    %383 = vmatprep.subr.mxu0 0.0
    %384 = vmatpush2.msra.mxu0 0.0
    %385 = vmatprep.subr.mxu0 0.0
    %386 = vmatpush2.msra.mxu0 0.0
    %387 = vmatprep.subr.mxu0 0.0
    %388 = vmatpush2.msra.mxu0 0.0
    %389 = vmatprep.subr.mxu0 0.0
    %390 = vmatpush2.msra.mxu0 0.0
    %391 = vmatprep.mubr.f32.mxu0 0.0
    %392 = vmatmul.mubr.f32.gmra.mxu0 %v326
    %v393 = vpop.f32.mrf.mxu0
    %v394 = vadd.f32 0.0, %v393
    %v395 = vpop.f32.mrf.mxu0
    %396 = vdwg.mxu0
    %v397 = vadd.f32 %v205, %v394
    %v398 = vtanh.pop %v397
    %399 = vmatprep.subr.mxu0 0.0
    %400 = vmatpush1.msra.mxu0 %v254
    %401 = vmatprep.subr.mxu0 0.0
    %402 = vmatpush1.msra.mxu0 %v253
    %403 = vmatprep.subr.mxu0 0.0
    %404 = vmatpush1.msra.mxu0 %v252
    %405 = vmatprep.subr.mxu0 0.0
    %406 = vmatpush1.msra.mxu0 %v251
    %407 = vmatprep.subr.mxu0 0.0
    %408 = vmatpush1.msra.mxu0 %v250
    %409 = vmatprep.subr.mxu0 0.0
    %410 = vmatpush1.msra.mxu0 %v249
    %411 = vmatprep.subr.mxu0 0.0
    %412 = vmatpush1.msra.mxu0 %v248
    %413 = vmatprep.subr.mxu0 0.0
    %414 = vmatpush1.msra.mxu0 %v247
    %415 = vmatprep.subr.mxu0 0.0
    %416 = vmatpush1.msra.mxu0 %v246
    %417 = vmatprep.subr.mxu0 0.0
    %418 = vmatpush1.msra.mxu0 %v245
    %419 = vmatprep.subr.mxu0 0.0
    %420 = vmatpush1.msra.mxu0 %v244
    %421 = vmatprep.subr.mxu0 0.0
    %422 = vmatpush1.msra.mxu0 %v243
    %423 = vmatprep.subr.mxu0 0.0
    %424 = vmatpush1.msra.mxu0 %v242
    %425 = vmatprep.subr.mxu0 0.0
    %426 = vmatpush1.msra.mxu0 %v241
    %427 = vmatprep.subr.mxu0 0.0
    %428 = vmatpush1.msra.mxu0 %v240
    %429 = vmatprep.subr.mxu0 0.0
    %430 = vmatpush1.msra.mxu0 %v239
    %431 = vmatprep.subr.mxu0 0.0
    %432 = vmatpush2.msra.mxu0 0.0
    %433 = vmatprep.subr.mxu0 0.0
    %434 = vmatpush2.msra.mxu0 0.0
    %435 = vmatprep.subr.mxu0 0.0
    %436 = vmatpush2.msra.mxu0 0.0
    %437 = vmatprep.subr.mxu0 0.0
    %438 = vmatpush2.msra.mxu0 0.0
    %439 = vmatprep.subr.mxu0 0.0
    %440 = vmatpush2.msra.mxu0 0.0
    %441 = vmatprep.subr.mxu0 0.0
    %442 = vmatpush2.msra.mxu0 0.0
    %443 = vmatprep.subr.mxu0 0.0
    %444 = vmatpush2.msra.mxu0 0.0
    %445 = vmatprep.subr.mxu0 0.0
    %446 = vmatpush2.msra.mxu0 0.0
    %447 = vmatprep.subr.mxu0 0.0
    %448 = vmatpush2.msra.mxu0 0.0
    %449 = vmatprep.subr.mxu0 0.0
    %450 = vmatpush2.msra.mxu0 0.0
    %451 = vmatprep.subr.mxu0 0.0
    %452 = vmatpush2.msra.mxu0 0.0
    %453 = vmatprep.subr.mxu0 0.0
    %454 = vmatpush2.msra.mxu0 0.0
    %455 = vmatprep.subr.mxu0 0.0
    %456 = vmatpush2.msra.mxu0 0.0
    %457 = vmatprep.subr.mxu0 0.0
    %458 = vmatpush2.msra.mxu0 0.0
    %459 = vmatprep.subr.mxu0 0.0
    %460 = vmatpush2.msra.mxu0 0.0
    %461 = vmatprep.subr.mxu0 0.0
    %462 = vmatpush2.msra.mxu0 0.0
    %463 = vmatprep.mubr.f32.mxu0 0.0
    %464 = vmatmul.mubr.f32.gmra.mxu0 %v398
    %v465 = vpop.f32.mrf.mxu0
    %v466 = vadd.f32 0.0, %v465
    %v467 = vpop.f32.mrf.mxu0
    %468 = vdwg.mxu0
    %v469 = vadd.f32 %v210, %v466
    %v470 = vtanh.pop %v469
    %471 = vmatprep.subr.mxu0 0.0
    %472 = vmatpush1.msra.mxu0 %v254
    %473 = vmatprep.subr.mxu0 0.0
    %474 = vmatpush1.msra.mxu0 %v253
    %475 = vmatprep.subr.mxu0 0.0
    %476 = vmatpush1.msra.mxu0 %v252
    %477 = vmatprep.subr.mxu0 0.0
    %478 = vmatpush1.msra.mxu0 %v251
    %479 = vmatprep.subr.mxu0 0.0
    %480 = vmatpush1.msra.mxu0 %v250
    %481 = vmatprep.subr.mxu0 0.0
    %482 = vmatpush1.msra.mxu0 %v249
    %483 = vmatprep.subr.mxu0 0.0
    %484 = vmatpush1.msra.mxu0 %v248
    %485 = vmatprep.subr.mxu0 0.0
    %486 = vmatpush1.msra.mxu0 %v247
    %487 = vmatprep.subr.mxu0 0.0
    %488 = vmatpush1.msra.mxu0 %v246
    %489 = vmatprep.subr.mxu0 0.0
    %490 = vmatpush1.msra.mxu0 %v245
    %491 = vmatprep.subr.mxu0 0.0
    %492 = vmatpush1.msra.mxu0 %v244
    %493 = vmatprep.subr.mxu0 0.0
    %494 = vmatpush1.msra.mxu0 %v243
    %495 = vmatprep.subr.mxu0 0.0
    %496 = vmatpush1.msra.mxu0 %v242
    %497 = vmatprep.subr.mxu0 0.0
    %498 = vmatpush1.msra.mxu0 %v241
    %499 = vmatprep.subr.mxu0 0.0
    %500 = vmatpush1.msra.mxu0 %v240
    %501 = vmatprep.subr.mxu0 0.0
    %502 = vmatpush1.msra.mxu0 %v239
    %503 = vmatprep.subr.mxu0 0.0
    %504 = vmatpush2.msra.mxu0 0.0
    %505 = vmatprep.subr.mxu0 0.0
    %506 = vmatpush2.msra.mxu0 0.0
    %507 = vmatprep.subr.mxu0 0.0
    %508 = vmatpush2.msra.mxu0 0.0
    %509 = vmatprep.subr.mxu0 0.0
    %510 = vmatpush2.msra.mxu0 0.0
    %511 = vmatprep.subr.mxu0 0.0
    %512 = vmatpush2.msra.mxu0 0.0
    %513 = vmatprep.subr.mxu0 0.0
    %514 = vmatpush2.msra.mxu0 0.0
    %515 = vmatprep.subr.mxu0 0.0
    %516 = vmatpush2.msra.mxu0 0.0
    %517 = vmatprep.subr.mxu0 0.0
    %518 = vmatpush2.msra.mxu0 0.0
    %519 = vmatprep.subr.mxu0 0.0
    %520 = vmatpush2.msra.mxu0 0.0
    %521 = vmatprep.subr.mxu0 0.0
    %522 = vmatpush2.msra.mxu0 0.0
    %523 = vmatprep.subr.mxu0 0.0
    %524 = vmatpush2.msra.mxu0 0.0
    %525 = vmatprep.subr.mxu0 0.0
    %526 = vmatpush2.msra.mxu0 0.0
    %527 = vmatprep.subr.mxu0 0.0
    %528 = vmatpush2.msra.mxu0 0.0
    %529 = vmatprep.subr.mxu0 0.0
    %530 = vmatpush2.msra.mxu0 0.0
    %531 = vmatprep.subr.mxu0 0.0
    %532 = vmatpush2.msra.mxu0 0.0
    %533 = vmatprep.subr.mxu0 0.0
    %534 = vmatpush2.msra.mxu0 0.0
    %535 = vmatprep.mubr.f32.mxu0 0.0
    %536 = vmatmul.mubr.f32.gmra.mxu0 %v470
    %v537 = vpop.f32.mrf.mxu0
    %v538 = vadd.f32 0.0, %v537
    %v539 = vpop.f32.mrf.mxu0
    %540 = vdwg.mxu0
    %v541 = vadd.f32 %v215, %v538
    %v542 = vtanh.pop %v541
    %543 = vmatprep.subr.mxu0 0.0
    %544 = vmatpush1.msra.mxu0 %v254
    %545 = vmatprep.subr.mxu0 0.0
    %546 = vmatpush1.msra.mxu0 %v253
    %547 = vmatprep.subr.mxu0 0.0
    %548 = vmatpush1.msra.mxu0 %v252
    %549 = vmatprep.subr.mxu0 0.0
    %550 = vmatpush1.msra.mxu0 %v251
    %551 = vmatprep.subr.mxu0 0.0
    %552 = vmatpush1.msra.mxu0 %v250
    %553 = vmatprep.subr.mxu0 0.0
    %554 = vmatpush1.msra.mxu0 %v249
    %555 = vmatprep.subr.mxu0 0.0
    %556 = vmatpush1.msra.mxu0 %v248
    %557 = vmatprep.subr.mxu0 0.0
    %558 = vmatpush1.msra.mxu0 %v247
    %559 = vmatprep.subr.mxu0 0.0
    %560 = vmatpush1.msra.mxu0 %v246
    %561 = vmatprep.subr.mxu0 0.0
    %562 = vmatpush1.msra.mxu0 %v245
    %563 = vmatprep.subr.mxu0 0.0
    %564 = vmatpush1.msra.mxu0 %v244
    %565 = vmatprep.subr.mxu0 0.0
    %566 = vmatpush1.msra.mxu0 %v243
    %567 = vmatprep.subr.mxu0 0.0
    %568 = vmatpush1.msra.mxu0 %v242
    %569 = vmatprep.subr.mxu0 0.0
    %570 = vmatpush1.msra.mxu0 %v241
    %571 = vmatprep.subr.mxu0 0.0
    %572 = vmatpush1.msra.mxu0 %v240
    %573 = vmatprep.subr.mxu0 0.0
    %574 = vmatpush1.msra.mxu0 %v239
    %575 = vmatprep.subr.mxu0 0.0
    %576 = vmatpush2.msra.mxu0 0.0
    %577 = vmatprep.subr.mxu0 0.0
    %578 = vmatpush2.msra.mxu0 0.0
    %579 = vmatprep.subr.mxu0 0.0
    %580 = vmatpush2.msra.mxu0 0.0
    %581 = vmatprep.subr.mxu0 0.0
    %582 = vmatpush2.msra.mxu0 0.0
    %583 = vmatprep.subr.mxu0 0.0
    %584 = vmatpush2.msra.mxu0 0.0
    %585 = vmatprep.subr.mxu0 0.0
    %586 = vmatpush2.msra.mxu0 0.0
    %587 = vmatprep.subr.mxu0 0.0
    %588 = vmatpush2.msra.mxu0 0.0
    %589 = vmatprep.subr.mxu0 0.0
    %590 = vmatpush2.msra.mxu0 0.0
    %591 = vmatprep.subr.mxu0 0.0
    %592 = vmatpush2.msra.mxu0 0.0
    %593 = vmatprep.subr.mxu0 0.0
    %594 = vmatpush2.msra.mxu0 0.0
    %595 = vmatprep.subr.mxu0 0.0
    %596 = vmatpush2.msra.mxu0 0.0
    %597 = vmatprep.subr.mxu0 0.0
    %598 = vmatpush2.msra.mxu0 0.0
    %599 = vmatprep.subr.mxu0 0.0
    %600 = vmatpush2.msra.mxu0 0.0
    %601 = vmatprep.subr.mxu0 0.0
    %602 = vmatpush2.msra.mxu0 0.0
    %603 = vmatprep.subr.mxu0 0.0
    %604 = vmatpush2.msra.mxu0 0.0
    %605 = vmatprep.subr.mxu0 0.0
    %606 = vmatpush2.msra.mxu0 0.0
    %607 = vmatprep.mubr.f32.mxu0 0.0
    %608 = vmatmul.mubr.f32.gmra.mxu0 %v542
    %v609 = vpop.f32.mrf.mxu0
    %v610 = vadd.f32 0.0, %v609
    %v611 = vpop.f32.mrf.mxu0
    %612 = vdwg.mxu0
    %v613 = vadd.f32 %v220, %v610
    %v614 = vtanh.pop %v613
    %615 = vmatprep.subr.mxu0 0.0
    %616 = vmatpush1.msra.mxu0 %v254
    %617 = vmatprep.subr.mxu0 0.0
    %618 = vmatpush1.msra.mxu0 %v253
    %619 = vmatprep.subr.mxu0 0.0
    %620 = vmatpush1.msra.mxu0 %v252
    %621 = vmatprep.subr.mxu0 0.0
    %622 = vmatpush1.msra.mxu0 %v251
    %623 = vmatprep.subr.mxu0 0.0
    %624 = vmatpush1.msra.mxu0 %v250
    %625 = vmatprep.subr.mxu0 0.0
    %626 = vmatpush1.msra.mxu0 %v249
    %627 = vmatprep.subr.mxu0 0.0
    %628 = vmatpush1.msra.mxu0 %v248
    %629 = vmatprep.subr.mxu0 0.0
    %630 = vmatpush1.msra.mxu0 %v247
    %631 = vmatprep.subr.mxu0 0.0
    %632 = vmatpush1.msra.mxu0 %v246
    %633 = vmatprep.subr.mxu0 0.0
    %634 = vmatpush1.msra.mxu0 %v245
    %635 = vmatprep.subr.mxu0 0.0
    %636 = vmatpush1.msra.mxu0 %v244
    %637 = vmatprep.subr.mxu0 0.0
    %638 = vmatpush1.msra.mxu0 %v243
    %639 = vmatprep.subr.mxu0 0.0
    %640 = vmatpush1.msra.mxu0 %v242
    %641 = vmatprep.subr.mxu0 0.0
    %642 = vmatpush1.msra.mxu0 %v241
    %643 = vmatprep.subr.mxu0 0.0
    %644 = vmatpush1.msra.mxu0 %v240
    %645 = vmatprep.subr.mxu0 0.0
    %646 = vmatpush1.msra.mxu0 %v239
    %647 = vmatprep.subr.mxu0 0.0
    %648 = vmatpush2.msra.mxu0 0.0
    %649 = vmatprep.subr.mxu0 0.0
    %650 = vmatpush2.msra.mxu0 0.0
    %651 = vmatprep.subr.mxu0 0.0
    %652 = vmatpush2.msra.mxu0 0.0
    %653 = vmatprep.subr.mxu0 0.0
    %654 = vmatpush2.msra.mxu0 0.0
    %655 = vmatprep.subr.mxu0 0.0
    %656 = vmatpush2.msra.mxu0 0.0
    %657 = vmatprep.subr.mxu0 0.0
    %658 = vmatpush2.msra.mxu0 0.0
    %659 = vmatprep.subr.mxu0 0.0
    %660 = vmatpush2.msra.mxu0 0.0
    %661 = vmatprep.subr.mxu0 0.0
    %662 = vmatpush2.msra.mxu0 0.0
    %663 = vmatprep.subr.mxu0 0.0
    %664 = vmatpush2.msra.mxu0 0.0
    %665 = vmatprep.subr.mxu0 0.0
    %666 = vmatpush2.msra.mxu0 0.0
    %667 = vmatprep.subr.mxu0 0.0
    %668 = vmatpush2.msra.mxu0 0.0
    %669 = vmatprep.subr.mxu0 0.0
    %670 = vmatpush2.msra.mxu0 0.0
    %671 = vmatprep.subr.mxu0 0.0
    %672 = vmatpush2.msra.mxu0 0.0
    %673 = vmatprep.subr.mxu0 0.0
    %674 = vmatpush2.msra.mxu0 0.0
    %675 = vmatprep.subr.mxu0 0.0
    %676 = vmatpush2.msra.mxu0 0.0
    %677 = vmatprep.subr.mxu0 0.0
    %678 = vmatpush2.msra.mxu0 0.0
    %679 = vmatprep.mubr.f32.mxu0 0.0
    %680 = vmatmul.mubr.f32.gmra.mxu0 %v614
    %v681 = vpop.f32.mrf.mxu0
    %v682 = vadd.f32 0.0, %v681
    %v683 = vpop.f32.mrf.mxu0
    %684 = vdwg.mxu0
    %v685 = vadd.f32 %v225, %v682
    %v686 = vtanh.pop %v685
    %687 = vmatprep.subr.mxu0 0.0
    %688 = vmatpush1.msra.mxu0 %v254
    %689 = vmatprep.subr.mxu0 0.0
    %690 = vmatpush1.msra.mxu0 %v253
    %691 = vmatprep.subr.mxu0 0.0
    %692 = vmatpush1.msra.mxu0 %v252
    %693 = vmatprep.subr.mxu0 0.0
    %694 = vmatpush1.msra.mxu0 %v251
    %695 = vmatprep.subr.mxu0 0.0
    %696 = vmatpush1.msra.mxu0 %v250
    %697 = vmatprep.subr.mxu0 0.0
    %698 = vmatpush1.msra.mxu0 %v249
    %699 = vmatprep.subr.mxu0 0.0
    %700 = vmatpush1.msra.mxu0 %v248
    %701 = vmatprep.subr.mxu0 0.0
    %702 = vmatpush1.msra.mxu0 %v247
    %703 = vmatprep.subr.mxu0 0.0
    %704 = vmatpush1.msra.mxu0 %v246
    %705 = vmatprep.subr.mxu0 0.0
    %706 = vmatpush1.msra.mxu0 %v245
    %707 = vmatprep.subr.mxu0 0.0
    %708 = vmatpush1.msra.mxu0 %v244
    %709 = vmatprep.subr.mxu0 0.0
    %710 = vmatpush1.msra.mxu0 %v243
    %711 = vmatprep.subr.mxu0 0.0
    %712 = vmatpush1.msra.mxu0 %v242
    %713 = vmatprep.subr.mxu0 0.0
    %714 = vmatpush1.msra.mxu0 %v241
    %715 = vmatprep.subr.mxu0 0.0
    %716 = vmatpush1.msra.mxu0 %v240
    %717 = vmatprep.subr.mxu0 0.0
    %718 = vmatpush1.msra.mxu0 %v239
    %719 = vmatprep.subr.mxu0 0.0
    %720 = vmatpush2.msra.mxu0 0.0
    %721 = vmatprep.subr.mxu0 0.0
    %722 = vmatpush2.msra.mxu0 0.0
    %723 = vmatprep.subr.mxu0 0.0
    %724 = vmatpush2.msra.mxu0 0.0
    %725 = vmatprep.subr.mxu0 0.0
    %726 = vmatpush2.msra.mxu0 0.0
    %727 = vmatprep.subr.mxu0 0.0
    %728 = vmatpush2.msra.mxu0 0.0
    %729 = vmatprep.subr.mxu0 0.0
    %730 = vmatpush2.msra.mxu0 0.0
    %731 = vmatprep.subr.mxu0 0.0
    %732 = vmatpush2.msra.mxu0 0.0
    %733 = vmatprep.subr.mxu0 0.0
    %734 = vmatpush2.msra.mxu0 0.0
    %735 = vmatprep.subr.mxu0 0.0
    %736 = vmatpush2.msra.mxu0 0.0
    %737 = vmatprep.subr.mxu0 0.0
    %738 = vmatpush2.msra.mxu0 0.0
    %739 = vmatprep.subr.mxu0 0.0
    %740 = vmatpush2.msra.mxu0 0.0
    %741 = vmatprep.subr.mxu0 0.0
    %742 = vmatpush2.msra.mxu0 0.0
    %743 = vmatprep.subr.mxu0 0.0
    %744 = vmatpush2.msra.mxu0 0.0
    %745 = vmatprep.subr.mxu0 0.0
    %746 = vmatpush2.msra.mxu0 0.0
    %747 = vmatprep.subr.mxu0 0.0
    %748 = vmatpush2.msra.mxu0 0.0
    %749 = vmatprep.subr.mxu0 0.0
    %750 = vmatpush2.msra.mxu0 0.0
    %751 = vmatprep.mubr.f32.mxu0 0.0
    %752 = vmatmul.mubr.f32.gmra.mxu0 %v686
    %v753 = vpop.f32.mrf.mxu0
    %v754 = vadd.f32 0.0, %v753
    %v755 = vpop.f32.mrf.mxu0
    %756 = vdwg.mxu0
    %v757 = vadd.f32 %v230, %v754
    %v758 = vtanh.pop %v757
    %759 = vmatprep.subr.mxu0 0.0
    %760 = vmatpush1.msra.mxu0 %v254
    %761 = vmatprep.subr.mxu0 0.0
    %762 = vmatpush1.msra.mxu0 %v253
    %763 = vmatprep.subr.mxu0 0.0
    %764 = vmatpush1.msra.mxu0 %v252
    %765 = vmatprep.subr.mxu0 0.0
    %766 = vmatpush1.msra.mxu0 %v251
    %767 = vmatprep.subr.mxu0 0.0
    %768 = vmatpush1.msra.mxu0 %v250
    %769 = vmatprep.subr.mxu0 0.0
    %770 = vmatpush1.msra.mxu0 %v249
    %771 = vmatprep.subr.mxu0 0.0
    %772 = vmatpush1.msra.mxu0 %v248
    %773 = vmatprep.subr.mxu0 0.0
    %774 = vmatpush1.msra.mxu0 %v247
    %775 = vmatprep.subr.mxu0 0.0
    %776 = vmatpush1.msra.mxu0 %v246
    %777 = vmatprep.subr.mxu0 0.0
    %778 = vmatpush1.msra.mxu0 %v245
    %779 = vmatprep.subr.mxu0 0.0
    %780 = vmatpush1.msra.mxu0 %v244
    %781 = vmatprep.subr.mxu0 0.0
    %782 = vmatpush1.msra.mxu0 %v243
    %783 = vmatprep.subr.mxu0 0.0
    %784 = vmatpush1.msra.mxu0 %v242
    %785 = vmatprep.subr.mxu0 0.0
    %786 = vmatpush1.msra.mxu0 %v241
    %787 = vmatprep.subr.mxu0 0.0
    %788 = vmatpush1.msra.mxu0 %v240
    %789 = vmatprep.subr.mxu0 0.0
    %790 = vmatpush1.msra.mxu0 %v239
    %791 = vmatprep.subr.mxu0 0.0
    %792 = vmatpush2.msra.mxu0 0.0
    %793 = vmatprep.subr.mxu0 0.0
    %794 = vmatpush2.msra.mxu0 0.0
    %795 = vmatprep.subr.mxu0 0.0
    %796 = vmatpush2.msra.mxu0 0.0
    %797 = vmatprep.subr.mxu0 0.0
    %798 = vmatpush2.msra.mxu0 0.0
    %799 = vmatprep.subr.mxu0 0.0
    %800 = vmatpush2.msra.mxu0 0.0
    %801 = vmatprep.subr.mxu0 0.0
    %802 = vmatpush2.msra.mxu0 0.0
    %803 = vmatprep.subr.mxu0 0.0
    %804 = vmatpush2.msra.mxu0 0.0
    %805 = vmatprep.subr.mxu0 0.0
    %806 = vmatpush2.msra.mxu0 0.0
    %807 = vmatprep.subr.mxu0 0.0
    %808 = vmatpush2.msra.mxu0 0.0
    %809 = vmatprep.subr.mxu0 0.0
    %810 = vmatpush2.msra.mxu0 0.0
    %811 = vmatprep.subr.mxu0 0.0
    %812 = vmatpush2.msra.mxu0 0.0
    %813 = vmatprep.subr.mxu0 0.0
    %814 = vmatpush2.msra.mxu0 0.0
    %815 = vmatprep.subr.mxu0 0.0
    %816 = vmatpush2.msra.mxu0 0.0
    %817 = vmatprep.subr.mxu0 0.0
    %818 = vmatpush2.msra.mxu0 0.0
    %819 = vmatprep.subr.mxu0 0.0
    %820 = vmatpush2.msra.mxu0 0.0
    %821 = vmatprep.subr.mxu0 0.0
    %822 = vmatpush2.msra.mxu0 0.0
    %823 = vmatprep.mubr.f32.mxu0 0.0
    %824 = vmatmul.mubr.f32.gmra.mxu0 %v758
    %v825 = vpop.f32.mrf.mxu0
    %v826 = vadd.f32 0.0, %v825
    %v827 = vpop.f32.mrf.mxu0
    %828 = vdwg.mxu0
    %v829 = vadd.f32 %v235, %v826
    %v830 = vtanh.pop %v829
    %831 = vst [vmem:[#allocation2] sm:$0xff] %v830
    // Predicated region
    $region54: #{tpu_custom_call.1} parent=1 // pred_check
      %p832 = pneg %p96
    $region55: #{tpu_custom_call.1} parent=1 // pred_check_branch
      %834 = sbr.rel (%p832) target = $region57
    $region56: #{tpu_custom_call.1} parent=1 // pred_region
      %v835 = vld [vmem:[#allocation11] sm:$0xff]
      %v836 = vld [vmem:[#allocation11 + $0x8] sm:$0xff]
      %v837 = vld [vmem:[#allocation11 + $0x10] sm:$0xff]
      %v838 = vld [vmem:[#allocation11 + $0x18] sm:$0xff]
      %v839 = vld [vmem:[#allocation11 + $0x20] sm:$0xff]
      %v840 = vld [vmem:[#allocation11 + $0x28] sm:$0xff]
      %v841 = vld [vmem:[#allocation11 + $0x30] sm:$0xff]
      %v842 = vld [vmem:[#allocation11 + $0x38] sm:$0xff]
      %v843 = vld [vmem:[#allocation11 + $0x40] sm:$0xff]
      %v844 = vld [vmem:[#allocation11 + $0x48] sm:$0xff]
      %v845 = vld [vmem:[#allocation11 + $0x50] sm:$0xff]
      %v846 = vld [vmem:[#allocation11 + $0x58] sm:$0xff]
      %v847 = vld [vmem:[#allocation11 + $0x60] sm:$0xff]
      %v848 = vld [vmem:[#allocation11 + $0x68] sm:$0xff]
      %v849 = vld [vmem:[#allocation11 + $0x70] sm:$0xff]
      %v850 = vld [vmem:[#allocation11 + $0x78] sm:$0xff]
      %v851 = vld [vmem:[%s6] sm:$0x1]
      %v853 = vlaneseq
      %v854 = vshrl.u32 %v853, 7
      %v855 = vsub.s32 0, %v854
      %v856 = vrot.slane %v851, %v855
      %858 = vmatprep.subr.mxu0 0.0
      %859 = vmatpush1.msra.mxu0 %v850
      %860 = vmatprep.subr.mxu0 0.0
      %861 = vmatpush1.msra.mxu0 %v849
      %862 = vmatprep.subr.mxu0 0.0
      %863 = vmatpush1.msra.mxu0 %v848
      %864 = vmatprep.subr.mxu0 0.0
      %865 = vmatpush1.msra.mxu0 %v847
      %866 = vmatprep.subr.mxu0 0.0
      %867 = vmatpush1.msra.mxu0 %v846
      %868 = vmatprep.subr.mxu0 0.0
      %869 = vmatpush1.msra.mxu0 %v845
      %870 = vmatprep.subr.mxu0 0.0
      %871 = vmatpush1.msra.mxu0 %v844
      %872 = vmatprep.subr.mxu0 0.0
      %873 = vmatpush1.msra.mxu0 %v843
      %874 = vmatprep.subr.mxu0 0.0
      %875 = vmatpush1.msra.mxu0 %v842
      %876 = vmatprep.subr.mxu0 0.0
      %877 = vmatpush1.msra.mxu0 %v841
      %878 = vmatprep.subr.mxu0 0.0
      %879 = vmatpush1.msra.mxu0 %v840
      %880 = vmatprep.subr.mxu0 0.0
      %881 = vmatpush1.msra.mxu0 %v839
      %882 = vmatprep.subr.mxu0 0.0
      %883 = vmatpush1.msra.mxu0 %v838
      %884 = vmatprep.subr.mxu0 0.0
      %885 = vmatpush1.msra.mxu0 %v837
      %886 = vmatprep.subr.mxu0 0.0
      %887 = vmatpush1.msra.mxu0 %v836
      %888 = vmatprep.subr.mxu0 0.0
      %889 = vmatpush1.msra.mxu0 %v835
      %890 = vmatprep.subr.mxu0 0.0
      %891 = vmatpush2.msra.mxu0 0.0
      %892 = vmatprep.subr.mxu0 0.0
      %893 = vmatpush2.msra.mxu0 0.0
      %894 = vmatprep.subr.mxu0 0.0
      %895 = vmatpush2.msra.mxu0 0.0
      %896 = vmatprep.subr.mxu0 0.0
      %897 = vmatpush2.msra.mxu0 0.0
      %898 = vmatprep.subr.mxu0 0.0
      %899 = vmatpush2.msra.mxu0 0.0
      %900 = vmatprep.subr.mxu0 0.0
      %901 = vmatpush2.msra.mxu0 0.0
      %902 = vmatprep.subr.mxu0 0.0
      %903 = vmatpush2.msra.mxu0 0.0
      %904 = vmatprep.subr.mxu0 0.0
      %905 = vmatpush2.msra.mxu0 0.0
      %906 = vmatprep.subr.mxu0 0.0
      %907 = vmatpush2.msra.mxu0 0.0
      %908 = vmatprep.subr.mxu0 0.0
      %909 = vmatpush2.msra.mxu0 0.0
      %910 = vmatprep.subr.mxu0 0.0
      %911 = vmatpush2.msra.mxu0 0.0
      %912 = vmatprep.subr.mxu0 0.0
      %913 = vmatpush2.msra.mxu0 0.0
      %914 = vmatprep.subr.mxu0 0.0
      %915 = vmatpush2.msra.mxu0 0.0
      %916 = vmatprep.subr.mxu0 0.0
      %917 = vmatpush2.msra.mxu0 0.0
      %918 = vmatprep.subr.mxu0 0.0
      %919 = vmatpush2.msra.mxu0 0.0
      %920 = vmatprep.subr.mxu0 0.0
      %921 = vmatpush2.msra.mxu0 0.0
      %922 = vmatprep.mubr.f32.mxu0 0.0
      %923 = vmatmul.mubr.f32.gmra.mxu0 %v830
      %v924 = vpop.f32.mrf.mxu0
      %v925 = vadd.f32 %v856, %v924
      %v926 = vpop.f32.mrf.mxu0
      %927 = vdwg.mxu0
      %928 = vmax.xlane.f32.xlu0 %v925
      %v929 = vpop.xlane.xlu0 %928
      %v930 = vsub.f32 %v925, %v929
      %v931 = vmul.f32 %v930, 1.442695
      %v932 = vpow.pop %v931
      %933 = vadd.xlane.f32.xlu0 %v932
      %v934 = vpop.xlane.xlu0 %933
      %v935 = vrcp.pop %v934
      %v936 = vmul.f32 %v932, %v935
      %937 = vst [vmem:[#allocation12] sm:$0xff] %v936
      %938 = vst [vmem:[#allocation13] sm:$0xff] %v830
    $region57: #{tpu_custom_call.1} parent=1 // pred_fallthru
      _
    // Predicated region
    $region58: #{tpu_custom_call.1} parent=1 // pred_check
      _
    $region59: #{tpu_custom_call.1} parent=1 // pred_check_branch
      %940 = sbr.rel (0) target = $region61
    $region60: #{tpu_custom_call.1} parent=1 // pred_region
      %s942 = ssub.s32 128, 128
      %943 = vsyncadd [#allocation5], %s942
      %s945 = sshll.u32 [#allocation12], 4
      %s946 = int_to_ptr.vmem [resolvable:$true] %s945
      %948 = dma.vmem_to_hbm [thread:$0]  %s946, 128, %s7, [#allocation5]
    $region61: #{tpu_custom_call.1} parent=1 // pred_fallthru
      _
    // Predicated region
    $region62: #{tpu_custom_call.1} parent=1 // pred_check
      _
    $region63: #{tpu_custom_call.1} parent=1 // pred_check_branch
      %950 = sbr.rel (0) target = $region65
    $region64: #{tpu_custom_call.1} parent=1 // pred_region
      %s952 = ssub.s32 128, 128
      %953 = vsyncadd [#allocation14], %s952
      %s955 = sshll.u32 [#allocation13], 4
      %s956 = int_to_ptr.vmem [resolvable:$true] %s955
      %958 = dma.vmem_to_hbm [thread:$0]  %s956, 128, %s8, [#allocation14]
    $region65: #{tpu_custom_call.1} parent=1 // pred_fallthru
      _
    // Predicated region
    $region66: #{tpu_custom_call.1} parent=1 // pred_check
      _
    $region67: #{tpu_custom_call.1} parent=1 // pred_check_branch
      %960 = sbr.rel (0) target = $region69
    $region68: #{tpu_custom_call.1} parent=1 // pred_region
      %961 = dma.done [#allocation5], 128
    $region69: #{tpu_custom_call.1} parent=1 // pred_fallthru
      _
    // Predicated region
    $region70: #{tpu_custom_call.1} parent=1 // pred_check
      _
    $region71: #{tpu_custom_call.1} parent=1 // pred_check_branch
      %963 = sbr.rel (0) target = $region73
    $region72: #{tpu_custom_call.1} parent=1 // pred_region
      %964 = dma.done [#allocation14], 128
    $region73: #{tpu_custom_call.1} parent=1 // pred_fallthru
      _
    %965 = vsyncpa [#allocation4], 1
    %966 = vsyncpa [#allocation7], 1
    %967 = vsyncpa [#allocation10], 1
    %968 = vsyncpa [#allocation5], 1
    %969 = vsyncpa [#allocation14], 1

</llo_original>
